<compile_context>
chip_gen: v5e
topology: v5e:2x2
jax: 0.10.0
libtpu: 0.0.40
codegen_flags: <defaults>
</compile_context>

<pallas_src>
import jax
import jax.numpy as jnp
from jax.experimental import pallas as pl
from jax.experimental.pallas import tpu as pltpu


# ----------------------------------------------------------------------------- kernel
def _make_transition_kernel(trainable: bool, n_extra_layers: int, matmul_dtype):
    """Fused Transition forward on group-packed tiles.

    Ref order (trainable=False):
      ob, ac, obs_min, obs_max, half_range, shift, w0_ob, w0_ac, b0,
      (w_l, b_l) * n_extra_layers, out
    Ref order (trainable=True): same but without obs_min / obs_max.
    """

    def kernel(*refs):
        ob_ref, ac_ref = refs[0], refs[1]
        if trainable:
            hr_ref, sh_ref, w0o_ref, w0a_ref, b0_ref = refs[2:7]
            rest = refs[7:-1]
        else:
            (omin_ref, omax_ref, hr_ref, sh_ref,
             w0o_ref, w0a_ref, b0_ref) = refs[2:9]
            rest = refs[9:-1]
        out_ref = refs[-1]
        assert len(rest) == 2 * n_extra_layers

        ob = ob_ref[...].astype(jnp.float32)
        ac = ac_ref[...].astype(jnp.float32)
        if not trainable:
            # torch.clamp(norm_obs_sim, min=obs_min, max=obs_max) (f32 VPU, dense vregs)
            ob = jnp.clip(ob, omin_ref[...], omax_ref[...])

        # First hidden layer: concat([ob, ac]) @ W0 == ob @ W0[:OB] + ac @ W0[OB:]
        # (block-diagonal replicated weights -> each packed group sees its own W0).
        h = (jnp.dot(ob.astype(matmul_dtype), w0o_ref[...],
                     preferred_element_type=jnp.float32)
             + jnp.dot(ac.astype(matmul_dtype), w0a_ref[...],
                       preferred_element_type=jnp.float32)
             + b0_ref[...])
        h = jnp.tanh(h)                          # f32 EUP (v5e-safe)

        for i in range(n_extra_layers):
            w = rest[2 * i][...]
            b = rest[2 * i + 1][...]
            h = jnp.dot(h.astype(matmul_dtype), w,
                        preferred_element_type=jnp.float32) + b
            if i < n_extra_layers - 1:           # the output Linear gets no activation
                h = jnp.tanh(h)

        # (tanh(x) + 1.001) / 2 * (max - min) + min  ==  tanh(x)*half_range + shift
        out = jnp.tanh(h) * hr_ref[...] + sh_ref[...]
        out_ref[...] = out.astype(out_ref.dtype)   # lane-dense (G*OB lanes) unmasked store

    return kernel


# ----------------------------------------------------------------------------- wrapper
def _round_up(x: int, m: int) -> int:
    return ((x + m - 1) // m) * m


def _auto_group(ob_dim, layer_dims, *, max_group=16, max_weight_bytes=12 << 20,
                itemsize=4):
    """Smallest power-of-two G such that the output width G*ob_dim reaches 128 lanes,
    capped by max_group and the materialized block-diagonal weight budget."""
    mac_elems = sum(layer_dims[l] * layer_dims[l + 1]
                    for l in range(len(layer_dims) - 1))
    g = 1
    while (g * ob_dim < 128) and (g < max_group):
        g2 = g * 2
        if g2 * g2 * mac_elems * itemsize > max_weight_bytes:
            break
        g = g2
    return g


def transition_forward(ob, ac, obs_min, obs_max, weights, biases, *,
                       trainable: bool,
                       matmul_dtype=jnp.float32,
                       block_rows: int = 4096,
                       group: int = None):
    """weights[l]: (in_l, out_l); biases[l]: (out_l,). Layer 0 consumes concat(ob, ac)."""
    B, OB = ob.shape
    AC = ac.shape[1]
    n_layers = len(weights)
    assert n_layers >= 2, "expect at least one hidden layer + output layer"
    assert weights[0].shape[0] == OB + AC
    assert weights[-1].shape[1] == OB
    dims = [OB + AC] + [int(w.shape[1]) for w in weights]

    mm_itemsize = jnp.dtype(matmul_dtype).itemsize
    G = int(group) if group is not None else _auto_group(OB, dims, itemsize=mm_itemsize)
    G = max(1, G)
    OBg, ACg = G * OB, G * AC

    # ---- batch packing & tiling (packed rows; each packed row = G batch rows) ----
    Bg = pl.cdiv(B, G)                       # packed rows needed to cover B
    Bg8 = _round_up(Bg, 8)                   # f32 sublane multiple
    TBg = max(8, _round_up(max(1, block_rows // G), 8))
    TBg = min(TBg, Bg8)
    # v7x megacore: make sure the "parallel" batch axis has >= 2 tiles when possible.
    if pl.cdiv(Bg8, TBg) < 2 and Bg8 >= 16:
        TBg = _round_up(pl.cdiv(Bg8, 2), 8)
    Bg_p = pl.cdiv(Bg8, TBg) * TBg           # padded packed-row count
    Bp = Bg_p * G                            # padded original-row count
    grid = (Bg_p // TBg,)

    ob_f = ob.astype(jnp.float32)
    ac_f = ac.astype(jnp.float32)
    if Bp != B:
        ob_f = jnp.pad(ob_f, ((0, Bp - B), (0, 0)))
        ac_f = jnp.pad(ac_f, ((0, Bp - B), (0, 0)))
    # Free contiguous reshapes (rows are contiguous) — no HBM transpose.
    ob_p = ob_f.reshape(Bg_p, OBg)
    ac_p = ac_f.reshape(Bg_p, ACg)

    # ---- G-tiled constants for clamp + folded rescale epilogue --------------------
    obs_min_t = jnp.tile(obs_min.astype(jnp.float32).reshape(-1), G).reshape(1, OBg)
    obs_max_t = jnp.tile(obs_max.astype(jnp.float32).reshape(-1), G).reshape(1, OBg)
    half_range = (obs_max_t - obs_min_t) * 0.5
    shift = obs_min_t + 1.001 * half_range

    # ---- block-diagonal replicated parameters -------------------------------------
    eye_g = jnp.eye(G, dtype=jnp.float32)

    def bdiag(w):                            # kron(I_G, W): G copies of W on the diagonal
        return jnp.kron(eye_g, w.astype(jnp.float32)).astype(matmul_dtype)

    def tile_bias(b, width):
        return jnp.tile(b.astype(jnp.float32).reshape(-1), G).reshape(1, G * width)

    w0 = weights[0].astype(jnp.float32)
    w0_ob = bdiag(w0[:OB, :])                # (G*OB, G*H1)
    w0_ac = bdiag(w0[OB:, :])                # (G*AC, G*H1)
    b0 = tile_bias(biases[0], dims[1])

    batch_map = lambda i: (i, 0)
    const_map = lambda i: (0, 0)

    args = [ob_p, ac_p]
    in_specs = [pl.BlockSpec((TBg, OBg), batch_map),
                pl.BlockSpec((TBg, ACg), batch_map)]
    if not trainable:                        # trainable path: no dead clamp refs
        args += [obs_min_t, obs_max_t]
        in_specs += [pl.BlockSpec((1, OBg), const_map),
                     pl.BlockSpec((1, OBg), const_map)]
    args += [half_range, shift, w0_ob, w0_ac, b0]
    in_specs += [pl.BlockSpec((1, OBg), const_map),
                 pl.BlockSpec((1, OBg), const_map),
                 pl.BlockSpec(w0_ob.shape, const_map),
                 pl.BlockSpec(w0_ac.shape, const_map),
                 pl.BlockSpec(b0.shape, const_map)]
    for l in range(1, n_layers):
        w_bd = bdiag(weights[l])
        b_t = tile_bias(biases[l], dims[l + 1])
        args += [w_bd, b_t]
        in_specs += [pl.BlockSpec(w_bd.shape, const_map),
                     pl.BlockSpec(b_t.shape, const_map)]

    out_spec = pl.BlockSpec((TBg, OBg), batch_map)

    # ---- advisory cost estimate ----------------------------------------------------
    w_elems = G * G * sum(dims[l] * dims[l + 1] for l in range(n_layers))
    w_bytes = w_elems * mm_itemsize
    b_bytes = 4 * G * sum(dims[1:])
    n_const = 2 if trainable else 4
    const_bytes = 4 * n_const * OBg
    io_bytes = Bp * (OB + AC + OB) * 4
    flops = 2 * Bg_p * w_elems                               # what the MXU actually does
    transcendentals = Bp * (sum(dims[1:-1]) + dims[-1])
    cost = pl.CostEstimate(flops=int(flops),
                           transcendentals=int(transcendentals),
                           bytes_accessed=int(io_bytes + w_bytes + b_bytes + const_bytes))

    # ---- VMEM budget: leave headroom under v7x's 64 MiB physical VMEM ---------------
    max_width = G * max(dims)
    vmem_bytes = (w_bytes + b_bytes + const_bytes
                  + 2 * 2 * TBg * (OBg + ACg + OBg) * 4      # double-buffered IO tiles
                  + 8 * TBg * max_width * 4                  # in-kernel activation headroom
                  + (4 << 20))
    try:
        cap = int(pltpu.get_tpu_info().vmem_capacity_bytes * 0.75)
    except Exception:
        cap = 48 << 20                                       # safe on v5e/v6e/v7x
    vmem_bytes = int(min(max(vmem_bytes, 16 << 20), cap))

    kernel = _make_transition_kernel(trainable, n_layers - 1, matmul_dtype)
    out_p = pl.pallas_call(
        kernel,
        out_shape=jax.ShapeDtypeStruct((Bg_p, OBg), jnp.float32),
        grid_spec=pltpu.PrefetchScalarGridSpec(
            num_scalar_prefetch=0,
            grid=grid,
            in_specs=in_specs,
            out_specs=out_spec,
        ),
        compiler_params=pltpu.CompilerParams(
            dimension_semantics=("parallel",),   # v7x: shard batch tiles over 2 TCs
            vmem_limit_bytes=vmem_bytes),
        cost_estimate=cost,
    )(*args)
    # Free contiguous un-pack reshape, then drop padded rows.
    return out_p.reshape(Bp, OB)[:B]


# ----------------------------------------------------------------------------- reference
def _reference_forward(ob, ac, obs_min, obs_max, weights, biases, *, trainable):
    ob = ob.astype(jnp.float32)
    ac = ac.astype(jnp.float32)
    if not trainable:
        ob = jnp.clip(ob, obs_min[None, :], obs_max[None, :])
    h = jnp.concatenate([ob, ac], axis=-1)
    n_layers = len(weights)
    for l in range(n_layers):
        h = h @ weights[l] + biases[l][None, :]
        if l < n_layers - 1:
            h = jnp.tanh(h)
    return (jnp.tanh(h) + 1.001) / 2.0 * (obs_max - obs_min)[None, :] + obs_min[None, :]


def _make_params(key, dims):
    """PyTorch-style Linear init: uniform(-1/sqrt(fan_in), 1/sqrt(fan_in))."""
    weights, biases = [], []
    for l in range(len(dims) - 1):
        key, kw, kb = jax.random.split(key, 3)
        bound = 1.0 / jnp.sqrt(jnp.float32(dims[l]))
        weights.append(jax.random.uniform(kw, (dims[l], dims[l + 1]),
                                          minval=-bound, maxval=bound,
                                          dtype=jnp.float32))
        biases.append(jax.random.uniform(kb, (dims[l + 1],),
                                         minval=-bound, maxval=bound,
                                         dtype=jnp.float32))
    return weights, biases


if __name__ == "__main__":
    # Configuration consistent with the module:
    # ob_shape=16, ac_shape=8, transition_hidden_dims=[32, 32].
    OB, AC = 16, 8
    hidden_dims = [32, 32]
    dims = [OB + AC] + hidden_dims + [OB]

    key = jax.random.PRNGKey(0)
    k_ob, k_ac, k_minmax, k_params, k_big = jax.random.split(key, 5)

    spread = jnp.abs(jax.random.normal(k_minmax, (OB,), dtype=jnp.float32)) + 0.5
    obs_min, obs_max = -spread, spread
    weights, biases = _make_params(k_params, dims)

    # --- case 1: B=8, non-trainable (clamp path), f32 MXU, tight tolerance -----
    B = 8
    ob_sim = jax.random.normal(k_ob, (B, OB), dtype=jnp.float32) * 2.0
    ac = jax.random.normal(k_ac, (B, AC), dtype=jnp.float32)
    out = transition_forward(ob_sim, ac, obs_min, obs_max, weights, biases,
                             trainable=False)
    out = jax.block_until_ready(out)
    ref = _reference_forward(ob_sim, ac, obs_min, obs_max, weights, biases,
                             trainable=False)
    assert out.shape == (B, OB)
    assert jnp.allclose(out, ref, atol=1e-5, rtol=1e-5), "f32 mismatch vs reference"

    # --- case 2: bf16 MXU path (f32 accumulation / epilogue), looser tolerance --
    out_bf = transition_forward(ob_sim, ac, obs_min, obs_max, weights, biases,
                                trainable=False, matmul_dtype=jnp.bfloat16)
    out_bf = jax.block_until_ready(out_bf)
    assert jnp.allclose(out_bf, ref, atol=5e-2, rtol=5e-2), "bf16 mismatch vs reference"

    # --- case 3: trainable path, multi-tile grid, group packing + batch padding --
    B2 = 1000
    k_ob2, k_ac2 = jax.random.split(k_big)
    ob2 = jax.random.normal(k_ob2, (B2, OB), dtype=jnp.float32) * 2.0
    ac2 = jax.random.normal(k_ac2, (B2, AC), dtype=jnp.float32)
    out2 = transition_forward(ob2, ac2, obs_min, obs_max, weights, biases,
                              trainable=True, block_rows=256)
    out2 = jax.block_until_ready(out2)
    ref2 = _reference_forward(ob2, ac2, obs_min, obs_max, weights, biases,
                              trainable=True)
    assert out2.shape == (B2, OB)
    assert jnp.allclose(out2, ref2, atol=1e-5, rtol=1e-5), "gridded mismatch vs reference"

    print("KERNEL_OK")
</pallas_src>

<mosaic_0001>
module attributes {stable_mosaic.version = 11 : i64} {
  func.func @kernel(%arg0: i32, %arg1: memref<8x128xf32, #tpu.memory_space<vmem>>, %arg2: memref<8x64xf32, #tpu.memory_space<vmem>>, %arg3: memref<1x128xf32, #tpu.memory_space<vmem>>, %arg4: memref<1x128xf32, #tpu.memory_space<vmem>>, %arg5: memref<1x128xf32, #tpu.memory_space<vmem>>, %arg6: memref<1x128xf32, #tpu.memory_space<vmem>>, %arg7: memref<128x256xf32, #tpu.memory_space<vmem>>, %arg8: memref<64x256xf32, #tpu.memory_space<vmem>>, %arg9: memref<1x256xf32, #tpu.memory_space<vmem>>, %arg10: memref<256x256xf32, #tpu.memory_space<vmem>>, %arg11: memref<1x256xf32, #tpu.memory_space<vmem>>, %arg12: memref<256x128xf32, #tpu.memory_space<vmem>>, %arg13: memref<1x128xf32, #tpu.memory_space<vmem>>, %arg14: memref<8x128xf32, #tpu.memory_space<vmem>>) attributes {dimension_semantics = [#tpu.dimension_semantics<parallel>], iteration_bounds = array<i64: 1>, scalar_prefetch = 0 : i64, scratch_operands = 0 : i64, tpu.core_type = #tpu.core_type<tc>, window_params = [{transform_indices = @transform_0, window_bounds = array<i64: 8, 128>}, {transform_indices = @transform_1, window_bounds = array<i64: 8, 64>}, {pipeline_mode = #tpu.pipeline_mode<synchronous>, transform_indices = @transform_2, window_bounds = array<i64: 1, 128>}, {pipeline_mode = #tpu.pipeline_mode<synchronous>, transform_indices = @transform_3, window_bounds = array<i64: 1, 128>}, {pipeline_mode = #tpu.pipeline_mode<synchronous>, transform_indices = @transform_4, window_bounds = array<i64: 1, 128>}, {pipeline_mode = #tpu.pipeline_mode<synchronous>, transform_indices = @transform_5, window_bounds = array<i64: 1, 128>}, {pipeline_mode = #tpu.pipeline_mode<synchronous>, transform_indices = @transform_6, window_bounds = array<i64: 128, 256>}, {pipeline_mode = #tpu.pipeline_mode<synchronous>, transform_indices = @transform_7, window_bounds = array<i64: 64, 256>}, {pipeline_mode = #tpu.pipeline_mode<synchronous>, transform_indices = @transform_8, window_bounds = array<i64: 1, 256>}, {pipeline_mode = #tpu.pipeline_mode<synchronous>, transform_indices = @transform_9, window_bounds = array<i64: 256, 256>}, {pipeline_mode = #tpu.pipeline_mode<synchronous>, transform_indices = @transform_10, window_bounds = array<i64: 1, 256>}, {pipeline_mode = #tpu.pipeline_mode<synchronous>, transform_indices = @transform_11, window_bounds = array<i64: 256, 128>}, {pipeline_mode = #tpu.pipeline_mode<synchronous>, transform_indices = @transform_12, window_bounds = array<i64: 1, 128>}, {transform_indices = @transform_13, window_bounds = array<i64: 8, 128>}]} {
    %c0 = arith.constant 0 : index
    %c0_0 = arith.constant 0 : index
    %0 = vector.load %arg1[%c0, %c0_0] : memref<8x128xf32, #tpu.memory_space<vmem>>, vector<8x128xf32>
    %c0_1 = arith.constant 0 : index
    %c0_2 = arith.constant 0 : index
    %1 = vector.load %arg2[%c0_1, %c0_2] : memref<8x64xf32, #tpu.memory_space<vmem>>, vector<8x64xf32>
    %c0_3 = arith.constant 0 : index
    %c0_4 = arith.constant 0 : index
    %2 = vector.load %arg3[%c0_3, %c0_4] : memref<1x128xf32, #tpu.memory_space<vmem>>, vector<1x128xf32>
    %c0_5 = arith.constant 0 : index
    %c0_6 = arith.constant 0 : index
    %3 = vector.load %arg4[%c0_5, %c0_6] : memref<1x128xf32, #tpu.memory_space<vmem>>, vector<1x128xf32>
    %4 = vector.broadcast %2 : vector<1x128xf32> to vector<8x128xf32>
    %5 = arith.maximumf %4, %0 : vector<8x128xf32>
    %6 = vector.broadcast %3 : vector<1x128xf32> to vector<8x128xf32>
    %7 = arith.minimumf %6, %5 : vector<8x128xf32>
    %c0_7 = arith.constant 0 : index
    %c0_8 = arith.constant 0 : index
    %8 = vector.load %arg7[%c0_7, %c0_8] : memref<128x256xf32, #tpu.memory_space<vmem>>, vector<128x256xf32>
    %cst = arith.constant dense<0.000000e+00> : vector<8x256xf32>
    %9 = tpu.matmul %7, %8, %cst {dimension_numbers = #tpu.dot_dimension_numbers<[1], [0], [0], [1], [0, 0, 1, 1], [], []>} : vector<8x128xf32>, vector<128x256xf32>, vector<8x256xf32> -> vector<8x256xf32>
    %c0_9 = arith.constant 0 : index
    %c0_10 = arith.constant 0 : index
    %10 = vector.load %arg8[%c0_9, %c0_10] : memref<64x256xf32, #tpu.memory_space<vmem>>, vector<64x256xf32>
    %cst_11 = arith.constant dense<0.000000e+00> : vector<8x256xf32>
    %11 = tpu.matmul %1, %10, %cst_11 {dimension_numbers = #tpu.dot_dimension_numbers<[1], [0], [0], [1], [0, 0, 1, 1], [], []>} : vector<8x64xf32>, vector<64x256xf32>, vector<8x256xf32> -> vector<8x256xf32>
    %12 = arith.addf %9, %11 : vector<8x256xf32>
    %c0_12 = arith.constant 0 : index
    %c0_13 = arith.constant 0 : index
    %13 = vector.load %arg9[%c0_12, %c0_13] : memref<1x256xf32, #tpu.memory_space<vmem>>, vector<1x256xf32>
    %14 = vector.broadcast %13 : vector<1x256xf32> to vector<8x256xf32>
    %15 = arith.addf %12, %14 : vector<8x256xf32>
    %16 = math.tanh %15 : vector<8x256xf32>
    %c0_14 = arith.constant 0 : index
    %c0_15 = arith.constant 0 : index
    %17 = vector.load %arg10[%c0_14, %c0_15] : memref<256x256xf32, #tpu.memory_space<vmem>>, vector<256x256xf32>
    %c0_16 = arith.constant 0 : index
    %c0_17 = arith.constant 0 : index
    %18 = vector.load %arg11[%c0_16, %c0_17] : memref<1x256xf32, #tpu.memory_space<vmem>>, vector<1x256xf32>
    %cst_18 = arith.constant dense<0.000000e+00> : vector<8x256xf32>
    %19 = tpu.matmul %16, %17, %cst_18 {dimension_numbers = #tpu.dot_dimension_numbers<[1], [0], [0], [1], [0, 0, 1, 1], [], []>} : vector<8x256xf32>, vector<256x256xf32>, vector<8x256xf32> -> vector<8x256xf32>
    %20 = vector.broadcast %18 : vector<1x256xf32> to vector<8x256xf32>
    %21 = arith.addf %19, %20 : vector<8x256xf32>
    %22 = math.tanh %21 : vector<8x256xf32>
    %c0_19 = arith.constant 0 : index
    %c0_20 = arith.constant 0 : index
    %23 = vector.load %arg12[%c0_19, %c0_20] : memref<256x128xf32, #tpu.memory_space<vmem>>, vector<256x128xf32>
    %c0_21 = arith.constant 0 : index
    %c0_22 = arith.constant 0 : index
    %24 = vector.load %arg13[%c0_21, %c0_22] : memref<1x128xf32, #tpu.memory_space<vmem>>, vector<1x128xf32>
    %cst_23 = arith.constant dense<0.000000e+00> : vector<8x128xf32>
    %25 = tpu.matmul %22, %23, %cst_23 {dimension_numbers = #tpu.dot_dimension_numbers<[1], [0], [0], [1], [0, 0, 1, 1], [], []>} : vector<8x256xf32>, vector<256x128xf32>, vector<8x128xf32> -> vector<8x128xf32>
    %26 = vector.broadcast %24 : vector<1x128xf32> to vector<8x128xf32>
    %27 = arith.addf %25, %26 : vector<8x128xf32>
    %28 = math.tanh %27 : vector<8x128xf32>
    %c0_24 = arith.constant 0 : index
    %c0_25 = arith.constant 0 : index
    %29 = vector.load %arg5[%c0_24, %c0_25] : memref<1x128xf32, #tpu.memory_space<vmem>>, vector<1x128xf32>
    %30 = vector.broadcast %29 : vector<1x128xf32> to vector<8x128xf32>
    %31 = arith.mulf %28, %30 : vector<8x128xf32>
    %c0_26 = arith.constant 0 : index
    %c0_27 = arith.constant 0 : index
    %32 = vector.load %arg6[%c0_26, %c0_27] : memref<1x128xf32, #tpu.memory_space<vmem>>, vector<1x128xf32>
    %33 = vector.broadcast %32 : vector<1x128xf32> to vector<8x128xf32>
    %34 = arith.addf %31, %33 : vector<8x128xf32>
    %c0_28 = arith.constant 0 : index
    %c0_29 = arith.constant 0 : index
    %35 = vector.load %arg14[%c0_28, %c0_29] : memref<8x128xf32, #tpu.memory_space<vmem>>, vector<8x128xf32>
    tpu.vector_store %arg14[%c0_28, %c0_29], %34 {strides = array<i32>} : memref<8x128xf32, #tpu.memory_space<vmem>>, vector<8x128xf32>,
    return
  }
  func.func @transform_0(%arg0: i32) -> (i32, i32) {
    %c0_i32 = arith.constant 0 : i32
    %c0_i32_0 = arith.constant 0 : i32
    return %arg0, %c0_i32 : i32, i32
  }
  func.func @transform_1(%arg0: i32) -> (i32, i32) {
    %c0_i32 = arith.constant 0 : i32
    %c0_i32_0 = arith.constant 0 : i32
    return %arg0, %c0_i32 : i32, i32
  }
  func.func @transform_2(%arg0: i32) -> (i32, i32) {
    %c0_i32 = arith.constant 0 : i32
    %c0_i32_0 = arith.constant 0 : i32
    %c0_i32_1 = arith.constant 0 : i32
    return %c0_i32, %c0_i32_0 : i32, i32
  }
  func.func @transform_3(%arg0: i32) -> (i32, i32) {
    %c0_i32 = arith.constant 0 : i32
    %c0_i32_0 = arith.constant 0 : i32
    %c0_i32_1 = arith.constant 0 : i32
    return %c0_i32, %c0_i32_0 : i32, i32
  }
  func.func @transform_4(%arg0: i32) -> (i32, i32) {
    %c0_i32 = arith.constant 0 : i32
    %c0_i32_0 = arith.constant 0 : i32
    %c0_i32_1 = arith.constant 0 : i32
    return %c0_i32, %c0_i32_0 : i32, i32
  }
  func.func @transform_5(%arg0: i32) -> (i32, i32) {
    %c0_i32 = arith.constant 0 : i32
    %c0_i32_0 = arith.constant 0 : i32
    %c0_i32_1 = arith.constant 0 : i32
    return %c0_i32, %c0_i32_0 : i32, i32
  }
  func.func @transform_6(%arg0: i32) -> (i32, i32) {
    %c0_i32 = arith.constant 0 : i32
    %c0_i32_0 = arith.constant 0 : i32
    %c0_i32_1 = arith.constant 0 : i32
    return %c0_i32, %c0_i32_0 : i32, i32
  }
  func.func @transform_7(%arg0: i32) -> (i32, i32) {
    %c0_i32 = arith.constant 0 : i32
    %c0_i32_0 = arith.constant 0 : i32
    %c0_i32_1 = arith.constant 0 : i32
    return %c0_i32, %c0_i32_0 : i32, i32
  }
  func.func @transform_8(%arg0: i32) -> (i32, i32) {
    %c0_i32 = arith.constant 0 : i32
    %c0_i32_0 = arith.constant 0 : i32
    %c0_i32_1 = arith.constant 0 : i32
    return %c0_i32, %c0_i32_0 : i32, i32
  }
  func.func @transform_9(%arg0: i32) -> (i32, i32) {
    %c0_i32 = arith.constant 0 : i32
    %c0_i32_0 = arith.constant 0 : i32
    %c0_i32_1 = arith.constant 0 : i32
    return %c0_i32, %c0_i32_0 : i32, i32
  }
  func.func @transform_10(%arg0: i32) -> (i32, i32) {
    %c0_i32 = arith.constant 0 : i32
    %c0_i32_0 = arith.constant 0 : i32
    %c0_i32_1 = arith.constant 0 : i32
    return %c0_i32, %c0_i32_0 : i32, i32
  }
  func.func @transform_11(%arg0: i32) -> (i32, i32) {
    %c0_i32 = arith.constant 0 : i32
    %c0_i32_0 = arith.constant 0 : i32
    %c0_i32_1 = arith.constant 0 : i32
    return %c0_i32, %c0_i32_0 : i32, i32
  }
  func.func @transform_12(%arg0: i32) -> (i32, i32) {
    %c0_i32 = arith.constant 0 : i32
    %c0_i32_0 = arith.constant 0 : i32
    %c0_i32_1 = arith.constant 0 : i32
    return %c0_i32, %c0_i32_0 : i32, i32
  }
  func.func @transform_13(%arg0: i32) -> (i32, i32) {
    %c0_i32 = arith.constant 0 : i32
    %c0_i32_0 = arith.constant 0 : i32
    return %arg0, %c0_i32 : i32, i32
  }
}

</mosaic_0001>

<llo_original>
// kernel: tpu_custom_call.1
$region0: #{tpu_custom_call.1}
  #allocation0 [shape = 'u32[]', space=smem, size = 0x4, offset = 0x4, fixed_abs, tag = 'smem constant byte address 0x4 - core index']
  #allocation1 [shape = 'u32[72,128]{1,0:T(1,128)}', space=vmem, size = 0x9000, scoped, tag = 'internal scratch']
  %s0 = inlined_call_operand.hbm [shape: f32[8,128], index: 0, kind: input, shape index: {}]
  %s1 = inlined_call_operand.hbm [shape: f32[8,64], index: 1, kind: input, shape index: {}]
  %s2 = inlined_call_operand.hbm [shape: f32[1,128], index: 2, kind: input, shape index: {}]
  %s3 = inlined_call_operand.hbm [shape: f32[1,128], index: 3, kind: input, shape index: {}]
  %s4 = inlined_call_operand.hbm [shape: f32[1,128], index: 4, kind: input, shape index: {}]
  %s5 = inlined_call_operand.hbm [shape: f32[1,128], index: 5, kind: input, shape index: {}]
  %s6 = inlined_call_operand.hbm [shape: f32[128,256], index: 6, kind: input, shape index: {}]
  %s7 = inlined_call_operand.hbm [shape: f32[64,256], index: 7, kind: input, shape index: {}]
  %s8 = inlined_call_operand.vmem [shape: f32[1,256], index: 8, kind: input, shape index: {}]
  %s9 = inlined_call_operand.hbm [shape: f32[256,256], index: 9, kind: input, shape index: {}]
  %s10 = inlined_call_operand.vmem [shape: f32[1,256], index: 10, kind: input, shape index: {}]
  %s11 = inlined_call_operand.hbm [shape: f32[256,128], index: 11, kind: input, shape index: {}]
  %s12 = inlined_call_operand.vmem [shape: f32[1,128], index: 12, kind: input, shape index: {}]
  %s13 = inlined_call_operand.hbm [shape: f32[8,128], index: 13, kind: output, shape index: {}]
  %s14 = sld [smem:[#allocation0]]
  $region102: #{tpu_custom_call.1} parent=0
    _
  %s16 = ssub.s32 1, %s14
  %s17 = scalar_select 0, %s16, %s14
  $region1: #{tpu_custom_call.1} parent=0
    #allocation2 [shape = 'u8[4096]{0}', space=vmem, size = 0x1000, scoped, tag = 'input window, operand 0, single buffered']
    #allocation3 [shape = 's32[1]{0}', space=sflag, size = 0x4, scoped, tag = 'scoped memory for tpu_custom_call.1']
    #allocation4 [shape = 's32[1]{0}', space=sflag, size = 0x4, scoped, tag = 'scoped memory for tpu_custom_call.1']
    #allocation5 [shape = 'u8[4096]{0}', space=vmem, size = 0x1000, scoped, tag = 'input window, operand 1, single buffered']
    #allocation6 [shape = 's32[1]{0}', space=sflag, size = 0x4, scoped, tag = 'scoped memory for tpu_custom_call.1']
    #allocation7 [shape = 'u8[512]{0}', space=vmem, size = 0x400, scoped, tag = 'input window, operand 2, single buffered']
    #allocation8 [shape = 'u8[512]{0}', space=vmem, size = 0x400, scoped, tag = 'input window, operand 3, single buffered']
    #allocation9 [shape = 's32[1]{0}', space=sflag, size = 0x4, scoped, tag = 'scoped memory for tpu_custom_call.1']
    #allocation10 [shape = 'u8[512]{0}', space=vmem, size = 0x400, scoped, tag = 'input window, operand 4, single buffered']
    #allocation11 [shape = 'u8[512]{0}', space=vmem, size = 0x400, scoped, tag = 'input window, operand 5, single buffered']
    #allocation12 [shape = 's32[1]{0}', space=sflag, size = 0x4, scoped, tag = 'scoped memory for tpu_custom_call.1']
    #allocation13 [shape = 'u8[131072]{0}', space=vmem, size = 0x20000, scoped, tag = 'input window, operand 6, single buffered']
    #allocation14 [shape = 'u8[65536]{0}', space=vmem, size = 0x10000, scoped, tag = 'input window, operand 7, single buffered']
    #allocation15 [shape = 's32[1]{0}', space=sflag, size = 0x4, scoped, tag = 'scoped memory for tpu_custom_call.1']
    #allocation16 [shape = 'u8[262144]{0}', space=vmem, size = 0x40000, scoped, tag = 'input window, operand 9, single buffered']
    #allocation17 [shape = 'u8[131072]{0}', space=vmem, size = 0x20000, scoped, tag = 'input window, operand 11, single buffered']
    #allocation18 [shape = 's32[1]{0}', space=sflag, size = 0x4, scoped, tag = 'scoped memory for tpu_custom_call.1']
    #allocation19 [shape = 'u8[4096]{0}', space=vmem, size = 0x1000, scoped, tag = 'output window, operand 0, single buffered']
    %18 = vsyncpa [#allocation3], 0
    %19 = vsyncpa [#allocation6], 0
    %20 = vsyncpa [#allocation9], 0
    %21 = vsyncpa [#allocation12], 0
    %22 = vsyncpa [#allocation15], 0
    %23 = vsyncpa [#allocation18], 0
    %24 = vsyncpa [#allocation4], 0
    // Predicated region
    $region2: #{tpu_custom_call.1} parent=1 // pred_check
      _
    $region3: #{tpu_custom_call.1} parent=1 // pred_check_branch
      %26 = sbr.rel (0) target = $region5
    $region4: #{tpu_custom_call.1} parent=1 // pred_region
      %28 = vsyncadd [#allocation3], 0
      %s30 = sshll.u32 %s0, 4
      %s31 = int_to_ptr.hbm [resolvable:$true] %s30
      %s32 = sshll.u32 [#allocation2], 4
      %s33 = int_to_ptr.vmem [resolvable:$true] %s32
      %35 = dma.hbm_to_vmem [thread:$0]  %s31, 128, %s33, [#allocation3]
    $region5: #{tpu_custom_call.1} parent=1 // pred_fallthru
      _
    // Predicated region
    $region6: #{tpu_custom_call.1} parent=1 // pred_check
      _
    $region7: #{tpu_custom_call.1} parent=1 // pred_check_branch
      %37 = sbr.rel (0) target = $region9
    $region8: #{tpu_custom_call.1} parent=1 // pred_region
      %39 = vsyncadd [#allocation6], 0
      %s41 = sshll.u32 %s1, 4
      %s42 = int_to_ptr.hbm [resolvable:$true] %s41
      %s43 = sshll.u32 [#allocation5], 4
      %s44 = int_to_ptr.vmem [resolvable:$true] %s43
      %46 = dma.hbm_to_vmem [thread:$0]  %s42, 128, %s44, [#allocation6]
    $region9: #{tpu_custom_call.1} parent=1 // pred_fallthru
      _
    // Predicated region
    $region10: #{tpu_custom_call.1} parent=1 // pred_check
      _
    $region11: #{tpu_custom_call.1} parent=1 // pred_check_branch
      %48 = sbr.rel (0) target = $region13
    $region12: #{tpu_custom_call.1} parent=1 // pred_region
      %50 = vsyncadd [#allocation6], 0
      %s52 = sshll.u32 %s2, 4
      %s53 = int_to_ptr.hbm [resolvable:$true] %s52
      %s54 = sshll.u32 [#allocation7], 4
      %s55 = int_to_ptr.vmem [resolvable:$true] %s54
      %57 = dma.hbm_to_vmem [thread:$0]  %s53, 16, %s55, [#allocation6]
    $region13: #{tpu_custom_call.1} parent=1 // pred_fallthru
      _
    // Predicated region
    $region14: #{tpu_custom_call.1} parent=1 // pred_check
      _
    $region15: #{tpu_custom_call.1} parent=1 // pred_check_branch
      %59 = sbr.rel (0) target = $region17
    $region16: #{tpu_custom_call.1} parent=1 // pred_region
      %61 = vsyncadd [#allocation9], 0
      %s63 = sshll.u32 %s3, 4
      %s64 = int_to_ptr.hbm [resolvable:$true] %s63
      %s65 = sshll.u32 [#allocation8], 4
      %s66 = int_to_ptr.vmem [resolvable:$true] %s65
      %68 = dma.hbm_to_vmem [thread:$0]  %s64, 16, %s66, [#allocation9]
    $region17: #{tpu_custom_call.1} parent=1 // pred_fallthru
      _
    // Predicated region
    $region18: #{tpu_custom_call.1} parent=1 // pred_check
      _
    $region19: #{tpu_custom_call.1} parent=1 // pred_check_branch
      %70 = sbr.rel (0) target = $region21
    $region20: #{tpu_custom_call.1} parent=1 // pred_region
      %72 = vsyncadd [#allocation9], 0
      %s74 = sshll.u32 %s4, 4
      %s75 = int_to_ptr.hbm [resolvable:$true] %s74
      %s76 = sshll.u32 [#allocation10], 4
      %s77 = int_to_ptr.vmem [resolvable:$true] %s76
      %79 = dma.hbm_to_vmem [thread:$0]  %s75, 16, %s77, [#allocation9]
    $region21: #{tpu_custom_call.1} parent=1 // pred_fallthru
      _
    // Predicated region
    $region22: #{tpu_custom_call.1} parent=1 // pred_check
      _
    $region23: #{tpu_custom_call.1} parent=1 // pred_check_branch
      %81 = sbr.rel (0) target = $region25
    $region24: #{tpu_custom_call.1} parent=1 // pred_region
      %83 = vsyncadd [#allocation12], 0
      %s85 = sshll.u32 %s5, 4
      %s86 = int_to_ptr.hbm [resolvable:$true] %s85
      %s87 = sshll.u32 [#allocation11], 4
      %s88 = int_to_ptr.vmem [resolvable:$true] %s87
      %90 = dma.hbm_to_vmem [thread:$0]  %s86, 16, %s88, [#allocation12]
    $region25: #{tpu_custom_call.1} parent=1 // pred_fallthru
      _
    // Predicated region
    $region26: #{tpu_custom_call.1} parent=1 // pred_check
      _
    $region27: #{tpu_custom_call.1} parent=1 // pred_check_branch
      %92 = sbr.rel (0) target = $region29
    $region28: #{tpu_custom_call.1} parent=1 // pred_region
      %94 = vsyncadd [#allocation12], 0
      %s95 = sshll.u32 %s6, 4
      %s96 = int_to_ptr.hbm [resolvable:$true] %s95
      %s97 = sshll.u32 [#allocation13], 4
      %s98 = int_to_ptr.vmem [resolvable:$true] %s97
      %103 = dma.hbm_to_vmem [thread:$0]  %s96, 4096, %s98, [#allocation12], 256, 256, 16
    $region29: #{tpu_custom_call.1} parent=1 // pred_fallthru
      _
    // Predicated region
    $region30: #{tpu_custom_call.1} parent=1 // pred_check
      _
    $region31: #{tpu_custom_call.1} parent=1 // pred_check_branch
      %105 = sbr.rel (0) target = $region33
    $region32: #{tpu_custom_call.1} parent=1 // pred_region
      %107 = vsyncadd [#allocation15], 0
      %s108 = sshll.u32 %s7, 4
      %s109 = int_to_ptr.hbm [resolvable:$true] %s108
      %s110 = sshll.u32 [#allocation14], 4
      %s111 = int_to_ptr.vmem [resolvable:$true] %s110
      %116 = dma.hbm_to_vmem [thread:$0]  %s109, 2048, %s111, [#allocation15], 256, 256, 16
    $region33: #{tpu_custom_call.1} parent=1 // pred_fallthru
      _
    // Predicated region
    $region34: #{tpu_custom_call.1} parent=1 // pred_check
      _
    $region35: #{tpu_custom_call.1} parent=1 // pred_check_branch
      %118 = sbr.rel (0) target = $region37
    $region36: #{tpu_custom_call.1} parent=1 // pred_region
      _
    $region37: #{tpu_custom_call.1} parent=1 // pred_fallthru
      _
    // Predicated region
    $region38: #{tpu_custom_call.1} parent=1 // pred_check
      _
    $region39: #{tpu_custom_call.1} parent=1 // pred_check_branch
      %120 = sbr.rel (0) target = $region41
    $region40: #{tpu_custom_call.1} parent=1 // pred_region
      %122 = vsyncadd [#allocation15], 0
      %s123 = sshll.u32 %s9, 4
      %s124 = int_to_ptr.hbm [resolvable:$true] %s123
      %s125 = sshll.u32 [#allocation16], 4
      %s126 = int_to_ptr.vmem [resolvable:$true] %s125
      %131 = dma.hbm_to_vmem [thread:$0]  %s124, 8192, %s126, [#allocation15], 256, 256, 16
    $region41: #{tpu_custom_call.1} parent=1 // pred_fallthru
      _
    // Predicated region
    $region42: #{tpu_custom_call.1} parent=1 // pred_check
      _
    $region43: #{tpu_custom_call.1} parent=1 // pred_check_branch
      %133 = sbr.rel (0) target = $region45
    $region44: #{tpu_custom_call.1} parent=1 // pred_region
      _
    $region45: #{tpu_custom_call.1} parent=1 // pred_fallthru
      _
    // Predicated region
    $region46: #{tpu_custom_call.1} parent=1 // pred_check
      _
    $region47: #{tpu_custom_call.1} parent=1 // pred_check_branch
      %135 = sbr.rel (0) target = $region49
    $region48: #{tpu_custom_call.1} parent=1 // pred_region
      %137 = vsyncadd [#allocation18], 0
      %s138 = sshll.u32 %s11, 4
      %s139 = int_to_ptr.hbm [resolvable:$true] %s138
      %s140 = sshll.u32 [#allocation17], 4
      %s141 = int_to_ptr.vmem [resolvable:$true] %s140
      %146 = dma.hbm_to_vmem [thread:$0]  %s139, 4096, %s141, [#allocation18], 128, 128, 8
    $region49: #{tpu_custom_call.1} parent=1 // pred_fallthru
      _
    // Predicated region
    $region50: #{tpu_custom_call.1} parent=1 // pred_check
      _
    $region51: #{tpu_custom_call.1} parent=1 // pred_check_branch
      %148 = sbr.rel (0) target = $region53
    $region52: #{tpu_custom_call.1} parent=1 // pred_region
      _
    $region53: #{tpu_custom_call.1} parent=1 // pred_fallthru
      _
    // Predicated region
    $region54: #{tpu_custom_call.1} parent=1 // pred_check
      _
    $region55: #{tpu_custom_call.1} parent=1 // pred_check_branch
      %150 = sbr.rel (0) target = $region57
    $region56: #{tpu_custom_call.1} parent=1 // pred_region
      %152 = dma.done [#allocation3], 128
    $region57: #{tpu_custom_call.1} parent=1 // pred_fallthru
      _
    // Predicated region
    $region58: #{tpu_custom_call.1} parent=1 // pred_check
      _
    $region59: #{tpu_custom_call.1} parent=1 // pred_check_branch
      %154 = sbr.rel (0) target = $region61
    $region60: #{tpu_custom_call.1} parent=1 // pred_region
      %156 = dma.done [#allocation6], 128
    $region61: #{tpu_custom_call.1} parent=1 // pred_fallthru
      _
    // Predicated region
    $region62: #{tpu_custom_call.1} parent=1 // pred_check
      _
    $region63: #{tpu_custom_call.1} parent=1 // pred_check_branch
      %158 = sbr.rel (0) target = $region65
    $region64: #{tpu_custom_call.1} parent=1 // pred_region
      %160 = dma.done [#allocation6], 16
    $region65: #{tpu_custom_call.1} parent=1 // pred_fallthru
      _
    // Predicated region
    $region66: #{tpu_custom_call.1} parent=1 // pred_check
      _
    $region67: #{tpu_custom_call.1} parent=1 // pred_check_branch
      %162 = sbr.rel (0) target = $region69
    $region68: #{tpu_custom_call.1} parent=1 // pred_region
      %164 = dma.done [#allocation9], 16
    $region69: #{tpu_custom_call.1} parent=1 // pred_fallthru
      _
    // Predicated region
    $region70: #{tpu_custom_call.1} parent=1 // pred_check
      _
    $region71: #{tpu_custom_call.1} parent=1 // pred_check_branch
      %166 = sbr.rel (0) target = $region73
    $region72: #{tpu_custom_call.1} parent=1 // pred_region
      %168 = dma.done [#allocation9], 16
    $region73: #{tpu_custom_call.1} parent=1 // pred_fallthru
      _
    // Predicated region
    $region74: #{tpu_custom_call.1} parent=1 // pred_check
      _
    $region75: #{tpu_custom_call.1} parent=1 // pred_check_branch
      %170 = sbr.rel (0) target = $region77
    $region76: #{tpu_custom_call.1} parent=1 // pred_region
      %172 = dma.done [#allocation12], 16
    $region77: #{tpu_custom_call.1} parent=1 // pred_fallthru
      _
    // Predicated region
    $region78: #{tpu_custom_call.1} parent=1 // pred_check
      _
    $region79: #{tpu_custom_call.1} parent=1 // pred_check_branch
      %174 = sbr.rel (0) target = $region81
    $region80: #{tpu_custom_call.1} parent=1 // pred_region
      %176 = dma.done [#allocation12], 4096
    $region81: #{tpu_custom_call.1} parent=1 // pred_fallthru
      _
    // Predicated region
    $region82: #{tpu_custom_call.1} parent=1 // pred_check
      _
    $region83: #{tpu_custom_call.1} parent=1 // pred_check_branch
      %178 = sbr.rel (0) target = $region85
    $region84: #{tpu_custom_call.1} parent=1 // pred_region
      %180 = dma.done [#allocation15], 2048
    $region85: #{tpu_custom_call.1} parent=1 // pred_fallthru
      _
    // Predicated region
    $region86: #{tpu_custom_call.1} parent=1 // pred_check
      _
    $region87: #{tpu_custom_call.1} parent=1 // pred_check_branch
      %182 = sbr.rel (0) target = $region89
    $region88: #{tpu_custom_call.1} parent=1 // pred_region
      %184 = dma.done [#allocation15], 8192
    $region89: #{tpu_custom_call.1} parent=1 // pred_fallthru
      _
    // Predicated region
    $region90: #{tpu_custom_call.1} parent=1 // pred_check
      _
    $region91: #{tpu_custom_call.1} parent=1 // pred_check_branch
      %186 = sbr.rel (0) target = $region93
    $region92: #{tpu_custom_call.1} parent=1 // pred_region
      %188 = dma.done [#allocation18], 4096
    $region93: #{tpu_custom_call.1} parent=1 // pred_fallthru
      _
    %v189 = vld [vmem:[#allocation2] sm:$0xff]
    %v190 = vld [vmem:[#allocation5] sm:$0xff]
    %v191 = vld [vmem:[#allocation7] sm:$0x1]
    %v192 = vld [vmem:[#allocation8] sm:$0x1]
    %v194 = vperm.slane %v191, 0
    %v196 = vmax.f32 %v194, %v189
    %v198 = vperm.slane %v192, 0
    %v200 = vmin.f32 %v198, %v196
    %v201 = vld [vmem:[#allocation13] sm:$0xff]
    %v202 = vld [vmem:[#allocation13 + $0x8] sm:$0xff]
    %v203 = vld [vmem:[#allocation13 + $0x10] sm:$0xff]
    %v204 = vld [vmem:[#allocation13 + $0x18] sm:$0xff]
    %v205 = vld [vmem:[#allocation13 + $0x20] sm:$0xff]
    %v206 = vld [vmem:[#allocation13 + $0x28] sm:$0xff]
    %v207 = vld [vmem:[#allocation13 + $0x30] sm:$0xff]
    %v208 = vld [vmem:[#allocation13 + $0x38] sm:$0xff]
    %v209 = vld [vmem:[#allocation13 + $0x40] sm:$0xff]
    %v210 = vld [vmem:[#allocation13 + $0x48] sm:$0xff]
    %v211 = vld [vmem:[#allocation13 + $0x50] sm:$0xff]
    %v212 = vld [vmem:[#allocation13 + $0x58] sm:$0xff]
    %v213 = vld [vmem:[#allocation13 + $0x60] sm:$0xff]
    %v214 = vld [vmem:[#allocation13 + $0x68] sm:$0xff]
    %v215 = vld [vmem:[#allocation13 + $0x70] sm:$0xff]
    %v216 = vld [vmem:[#allocation13 + $0x78] sm:$0xff]
    %v217 = vld [vmem:[#allocation13 + $0x80] sm:$0xff]
    %v218 = vld [vmem:[#allocation13 + $0x88] sm:$0xff]
    %v219 = vld [vmem:[#allocation13 + $0x90] sm:$0xff]
    %v220 = vld [vmem:[#allocation13 + $0x98] sm:$0xff]
    %v221 = vld [vmem:[#allocation13 + $0xa0] sm:$0xff]
    %v222 = vld [vmem:[#allocation13 + $0xa8] sm:$0xff]
    %v223 = vld [vmem:[#allocation13 + $0xb0] sm:$0xff]
    %v224 = vld [vmem:[#allocation13 + $0xb8] sm:$0xff]
    %v225 = vld [vmem:[#allocation13 + $0xc0] sm:$0xff]
    %v226 = vld [vmem:[#allocation13 + $0xc8] sm:$0xff]
    %v227 = vld [vmem:[#allocation13 + $0xd0] sm:$0xff]
    %v228 = vld [vmem:[#allocation13 + $0xd8] sm:$0xff]
    %v229 = vld [vmem:[#allocation13 + $0xe0] sm:$0xff]
    %v230 = vld [vmem:[#allocation13 + $0xe8] sm:$0xff]
    %v231 = vld [vmem:[#allocation13 + $0xf0] sm:$0xff]
    %v232 = vld [vmem:[#allocation13 + $0xf8] sm:$0xff]
    %v233 = vld [vmem:[#allocation14] sm:$0xff]
    %v234 = vld [vmem:[#allocation14 + $0x8] sm:$0xff]
    %v235 = vld [vmem:[#allocation14 + $0x10] sm:$0xff]
    %v236 = vld [vmem:[#allocation14 + $0x18] sm:$0xff]
    %v237 = vld [vmem:[#allocation14 + $0x20] sm:$0xff]
    %v238 = vld [vmem:[#allocation14 + $0x28] sm:$0xff]
    %v239 = vld [vmem:[#allocation14 + $0x30] sm:$0xff]
    %v240 = vld [vmem:[#allocation14 + $0x38] sm:$0xff]
    %v241 = vld [vmem:[#allocation14 + $0x40] sm:$0xff]
    %v242 = vld [vmem:[#allocation14 + $0x48] sm:$0xff]
    %v243 = vld [vmem:[#allocation14 + $0x50] sm:$0xff]
    %v244 = vld [vmem:[#allocation14 + $0x58] sm:$0xff]
    %v245 = vld [vmem:[#allocation14 + $0x60] sm:$0xff]
    %v246 = vld [vmem:[#allocation14 + $0x68] sm:$0xff]
    %v247 = vld [vmem:[#allocation14 + $0x70] sm:$0xff]
    %v248 = vld [vmem:[#allocation14 + $0x78] sm:$0xff]
    %vm249 = vcmask 523264
    %v251 = vsel %vm249, %v190, 0
    %253 = vmatpush.msra.mxu0 0.0
    %254 = vmatpush.msra.mxu0 0.0
    %255 = vmatpush.msra.mxu0 0.0
    %256 = vmatpush.msra.mxu0 0.0
    %257 = vmatpush.msra.mxu0 0.0
    %258 = vmatpush.msra.mxu0 0.0
    %259 = vmatpush.msra.mxu0 0.0
    %260 = vmatpush.msra.mxu0 0.0
    %261 = vmatpush.msra.mxu0 %v247
    %262 = vmatpush.msra.mxu0 %v245
    %263 = vmatpush.msra.mxu0 %v243
    %264 = vmatpush.msra.mxu0 %v241
    %265 = vmatpush.msra.mxu0 %v239
    %266 = vmatpush.msra.mxu0 %v237
    %267 = vmatpush.msra.mxu0 %v235
    %268 = vmatpush.msra.mxu0 %v233
    %269 = vmatmul.f32.gmra.mxu0 %v251
    %v270 = vpop.f32.mrf.mxu0
    %v271 = vadd.f32 0.0, %v270
    %272 = vdwg.mxu0
    %273 = vmatpush.msra.mxu0 0.0
    %274 = vmatpush.msra.mxu0 0.0
    %275 = vmatpush.msra.mxu0 0.0
    %276 = vmatpush.msra.mxu0 0.0
    %277 = vmatpush.msra.mxu0 0.0
    %278 = vmatpush.msra.mxu0 0.0
    %279 = vmatpush.msra.mxu0 0.0
    %280 = vmatpush.msra.mxu0 0.0
    %281 = vmatpush.msra.mxu0 %v248
    %282 = vmatpush.msra.mxu0 %v246
    %283 = vmatpush.msra.mxu0 %v244
    %284 = vmatpush.msra.mxu0 %v242
    %285 = vmatpush.msra.mxu0 %v240
    %286 = vmatpush.msra.mxu0 %v238
    %287 = vmatpush.msra.mxu0 %v236
    %288 = vmatpush.msra.mxu0 %v234
    %289 = vmatmul.f32.gmra.mxu0 %v251
    %v290 = vpop.f32.mrf.mxu0
    %v291 = vadd.f32 0.0, %v290
    %292 = vdwg.mxu0
    %293 = vmatpush.msra.mxu0 %v231
    %294 = vmatpush.msra.mxu0 %v229
    %295 = vmatpush.msra.mxu0 %v227
    %296 = vmatpush.msra.mxu0 %v225
    %297 = vmatpush.msra.mxu0 %v223
    %298 = vmatpush.msra.mxu0 %v221
    %299 = vmatpush.msra.mxu0 %v219
    %300 = vmatpush.msra.mxu0 %v217
    %301 = vmatpush.msra.mxu0 %v215
    %302 = vmatpush.msra.mxu0 %v213
    %303 = vmatpush.msra.mxu0 %v211
    %304 = vmatpush.msra.mxu0 %v209
    %305 = vmatpush.msra.mxu0 %v207
    %306 = vmatpush.msra.mxu0 %v205
    %307 = vmatpush.msra.mxu0 %v203
    %308 = vmatpush.msra.mxu0 %v201
    %309 = vmatmul.f32.gmra.mxu0 %v200
    %v310 = vpop.f32.mrf.mxu0
    %v311 = vadd.f32 %v271, %v310
    %312 = vdwg.mxu0
    %313 = vmatpush.msra.mxu0 %v232
    %314 = vmatpush.msra.mxu0 %v230
    %315 = vmatpush.msra.mxu0 %v228
    %316 = vmatpush.msra.mxu0 %v226
    %317 = vmatpush.msra.mxu0 %v224
    %318 = vmatpush.msra.mxu0 %v222
    %319 = vmatpush.msra.mxu0 %v220
    %320 = vmatpush.msra.mxu0 %v218
    %321 = vmatpush.msra.mxu0 %v216
    %322 = vmatpush.msra.mxu0 %v214
    %323 = vmatpush.msra.mxu0 %v212
    %324 = vmatpush.msra.mxu0 %v210
    %325 = vmatpush.msra.mxu0 %v208
    %326 = vmatpush.msra.mxu0 %v206
    %327 = vmatpush.msra.mxu0 %v204
    %328 = vmatpush.msra.mxu0 %v202
    %329 = vmatmul.f32.gmra.mxu0 %v200
    %v330 = vpop.f32.mrf.mxu0
    %v331 = vadd.f32 %v291, %v330
    %332 = vdwg.mxu0
    %v333 = vld [vmem:[%s8] sm:$0x3]
    %v335 = vperm.slane %v333, 0
    %v336 = vperm.slane %v333, 1
    %v339 = vadd.f32 %v311, %v335
    %v340 = vadd.f32 %v331, %v336
    %v341 = vtanh.pop %v339
    %v342 = vtanh.pop %v340
    %v343 = vld [vmem:[#allocation16] sm:$0xff]
    %v344 = vld [vmem:[#allocation16 + $0x8] sm:$0xff]
    %v345 = vld [vmem:[#allocation16 + $0x10] sm:$0xff]
    %v346 = vld [vmem:[#allocation16 + $0x18] sm:$0xff]
    %v347 = vld [vmem:[#allocation16 + $0x20] sm:$0xff]
    %v348 = vld [vmem:[#allocation16 + $0x28] sm:$0xff]
    %v349 = vld [vmem:[#allocation16 + $0x30] sm:$0xff]
    %v350 = vld [vmem:[#allocation16 + $0x38] sm:$0xff]
    %v351 = vld [vmem:[#allocation16 + $0x40] sm:$0xff]
    %v352 = vld [vmem:[#allocation16 + $0x48] sm:$0xff]
    %v353 = vld [vmem:[#allocation16 + $0x50] sm:$0xff]
    %v354 = vld [vmem:[#allocation16 + $0x58] sm:$0xff]
    %v355 = vld [vmem:[#allocation16 + $0x60] sm:$0xff]
    %v356 = vld [vmem:[#allocation16 + $0x68] sm:$0xff]
    %v357 = vld [vmem:[#allocation16 + $0x70] sm:$0xff]
    %v358 = vld [vmem:[#allocation16 + $0x78] sm:$0xff]
    %v359 = vld [vmem:[#allocation16 + $0x80] sm:$0xff]
    %v360 = vld [vmem:[#allocation16 + $0x88] sm:$0xff]
    %v361 = vld [vmem:[#allocation16 + $0x90] sm:$0xff]
    %v362 = vld [vmem:[#allocation16 + $0x98] sm:$0xff]
    %v363 = vld [vmem:[#allocation16 + $0xa0] sm:$0xff]
    %v364 = vld [vmem:[#allocation16 + $0xa8] sm:$0xff]
    %v365 = vld [vmem:[#allocation16 + $0xb0] sm:$0xff]
    %v366 = vld [vmem:[#allocation16 + $0xb8] sm:$0xff]
    %v367 = vld [vmem:[#allocation16 + $0xc0] sm:$0xff]
    %v368 = vld [vmem:[#allocation16 + $0xc8] sm:$0xff]
    %v369 = vld [vmem:[#allocation16 + $0xd0] sm:$0xff]
    %v370 = vld [vmem:[#allocation16 + $0xd8] sm:$0xff]
    %v371 = vld [vmem:[#allocation16 + $0xe0] sm:$0xff]
    %v372 = vld [vmem:[#allocation16 + $0xe8] sm:$0xff]
    %v373 = vld [vmem:[#allocation16 + $0xf0] sm:$0xff]
    %v374 = vld [vmem:[#allocation16 + $0xf8] sm:$0xff]
    %v375 = vld [vmem:[#allocation16 + $0x100] sm:$0xff]
    %v376 = vld [vmem:[#allocation16 + $0x108] sm:$0xff]
    %v377 = vld [vmem:[#allocation16 + $0x110] sm:$0xff]
    %v378 = vld [vmem:[#allocation16 + $0x118] sm:$0xff]
    %v379 = vld [vmem:[#allocation16 + $0x120] sm:$0xff]
    %v380 = vld [vmem:[#allocation16 + $0x128] sm:$0xff]
    %v381 = vld [vmem:[#allocation16 + $0x130] sm:$0xff]
    %v382 = vld [vmem:[#allocation16 + $0x138] sm:$0xff]
    %v383 = vld [vmem:[#allocation16 + $0x140] sm:$0xff]
    %v384 = vld [vmem:[#allocation16 + $0x148] sm:$0xff]
    %v385 = vld [vmem:[#allocation16 + $0x150] sm:$0xff]
    %v386 = vld [vmem:[#allocation16 + $0x158] sm:$0xff]
    %v387 = vld [vmem:[#allocation16 + $0x160] sm:$0xff]
    %v388 = vld [vmem:[#allocation16 + $0x168] sm:$0xff]
    %v389 = vld [vmem:[#allocation16 + $0x170] sm:$0xff]
    %v390 = vld [vmem:[#allocation16 + $0x178] sm:$0xff]
    %v391 = vld [vmem:[#allocation16 + $0x180] sm:$0xff]
    %v392 = vld [vmem:[#allocation16 + $0x188] sm:$0xff]
    %v393 = vld [vmem:[#allocation16 + $0x190] sm:$0xff]
    %v394 = vld [vmem:[#allocation16 + $0x198] sm:$0xff]
    %v395 = vld [vmem:[#allocation16 + $0x1a0] sm:$0xff]
    %v396 = vld [vmem:[#allocation16 + $0x1a8] sm:$0xff]
    %v397 = vld [vmem:[#allocation16 + $0x1b0] sm:$0xff]
    %v398 = vld [vmem:[#allocation16 + $0x1b8] sm:$0xff]
    %v399 = vld [vmem:[#allocation16 + $0x1c0] sm:$0xff]
    %v400 = vld [vmem:[#allocation16 + $0x1c8] sm:$0xff]
    %v401 = vld [vmem:[#allocation16 + $0x1d0] sm:$0xff]
    %v402 = vld [vmem:[#allocation16 + $0x1d8] sm:$0xff]
    %v403 = vld [vmem:[#allocation16 + $0x1e0] sm:$0xff]
    %v404 = vld [vmem:[#allocation16 + $0x1e8] sm:$0xff]
    %v405 = vld [vmem:[#allocation16 + $0x1f0] sm:$0xff]
    %v406 = vld [vmem:[#allocation16 + $0x1f8] sm:$0xff]
    %v407 = vld [vmem:[%s10] sm:$0x3]
    %v409 = vperm.slane %v407, 0
    %v410 = vperm.slane %v407, 1
    %413 = vmatpush.msra.mxu0 %v373
    %414 = vmatpush.msra.mxu0 %v371
    %415 = vmatpush.msra.mxu0 %v369
    %416 = vmatpush.msra.mxu0 %v367
    %417 = vmatpush.msra.mxu0 %v365
    %418 = vmatpush.msra.mxu0 %v363
    %419 = vmatpush.msra.mxu0 %v361
    %420 = vmatpush.msra.mxu0 %v359
    %421 = vmatpush.msra.mxu0 %v357
    %422 = vmatpush.msra.mxu0 %v355
    %423 = vmatpush.msra.mxu0 %v353
    %424 = vmatpush.msra.mxu0 %v351
    %425 = vmatpush.msra.mxu0 %v349
    %426 = vmatpush.msra.mxu0 %v347
    %427 = vmatpush.msra.mxu0 %v345
    %428 = vmatpush.msra.mxu0 %v343
    %429 = vmatmul.f32.gmra.mxu0 %v341
    %v430 = vpop.f32.mrf.mxu0
    %v431 = vadd.f32 %v409, %v430
    %432 = vdwg.mxu0
    %433 = vmatpush.msra.mxu0 %v405
    %434 = vmatpush.msra.mxu0 %v403
    %435 = vmatpush.msra.mxu0 %v401
    %436 = vmatpush.msra.mxu0 %v399
    %437 = vmatpush.msra.mxu0 %v397
    %438 = vmatpush.msra.mxu0 %v395
    %439 = vmatpush.msra.mxu0 %v393
    %440 = vmatpush.msra.mxu0 %v391
    %441 = vmatpush.msra.mxu0 %v389
    %442 = vmatpush.msra.mxu0 %v387
    %443 = vmatpush.msra.mxu0 %v385
    %444 = vmatpush.msra.mxu0 %v383
    %445 = vmatpush.msra.mxu0 %v381
    %446 = vmatpush.msra.mxu0 %v379
    %447 = vmatpush.msra.mxu0 %v377
    %448 = vmatpush.msra.mxu0 %v375
    %449 = vmatmul.f32.gmra.mxu0 %v342
    %v450 = vpop.f32.mrf.mxu0
    %v451 = vadd.f32 %v431, %v450
    %452 = vdwg.mxu0
    %453 = vmatpush.msra.mxu0 %v374
    %454 = vmatpush.msra.mxu0 %v372
    %455 = vmatpush.msra.mxu0 %v370
    %456 = vmatpush.msra.mxu0 %v368
    %457 = vmatpush.msra.mxu0 %v366
    %458 = vmatpush.msra.mxu0 %v364
    %459 = vmatpush.msra.mxu0 %v362
    %460 = vmatpush.msra.mxu0 %v360
    %461 = vmatpush.msra.mxu0 %v358
    %462 = vmatpush.msra.mxu0 %v356
    %463 = vmatpush.msra.mxu0 %v354
    %464 = vmatpush.msra.mxu0 %v352
    %465 = vmatpush.msra.mxu0 %v350
    %466 = vmatpush.msra.mxu0 %v348
    %467 = vmatpush.msra.mxu0 %v346
    %468 = vmatpush.msra.mxu0 %v344
    %469 = vmatmul.f32.gmra.mxu0 %v341
    %v470 = vpop.f32.mrf.mxu0
    %v471 = vadd.f32 %v410, %v470
    %472 = vdwg.mxu0
    %473 = vmatpush.msra.mxu0 %v406
    %474 = vmatpush.msra.mxu0 %v404
    %475 = vmatpush.msra.mxu0 %v402
    %476 = vmatpush.msra.mxu0 %v400
    %477 = vmatpush.msra.mxu0 %v398
    %478 = vmatpush.msra.mxu0 %v396
    %479 = vmatpush.msra.mxu0 %v394
    %480 = vmatpush.msra.mxu0 %v392
    %481 = vmatpush.msra.mxu0 %v390
    %482 = vmatpush.msra.mxu0 %v388
    %483 = vmatpush.msra.mxu0 %v386
    %484 = vmatpush.msra.mxu0 %v384
    %485 = vmatpush.msra.mxu0 %v382
    %486 = vmatpush.msra.mxu0 %v380
    %487 = vmatpush.msra.mxu0 %v378
    %488 = vmatpush.msra.mxu0 %v376
    %489 = vmatmul.f32.gmra.mxu0 %v342
    %v490 = vpop.f32.mrf.mxu0
    %v491 = vadd.f32 %v471, %v490
    %492 = vdwg.mxu0
    %v493 = vtanh.pop %v451
    %v494 = vtanh.pop %v491
    %v495 = vld [vmem:[#allocation17] sm:$0xff]
    %v496 = vld [vmem:[#allocation17 + $0x8] sm:$0xff]
    %v497 = vld [vmem:[#allocation17 + $0x10] sm:$0xff]
    %v498 = vld [vmem:[#allocation17 + $0x18] sm:$0xff]
    %v499 = vld [vmem:[#allocation17 + $0x20] sm:$0xff]
    %v500 = vld [vmem:[#allocation17 + $0x28] sm:$0xff]
    %v501 = vld [vmem:[#allocation17 + $0x30] sm:$0xff]
    %v502 = vld [vmem:[#allocation17 + $0x38] sm:$0xff]
    %v503 = vld [vmem:[#allocation17 + $0x40] sm:$0xff]
    %v504 = vld [vmem:[#allocation17 + $0x48] sm:$0xff]
    %v505 = vld [vmem:[#allocation17 + $0x50] sm:$0xff]
    %v506 = vld [vmem:[#allocation17 + $0x58] sm:$0xff]
    %v507 = vld [vmem:[#allocation17 + $0x60] sm:$0xff]
    %v508 = vld [vmem:[#allocation17 + $0x68] sm:$0xff]
    %v509 = vld [vmem:[#allocation17 + $0x70] sm:$0xff]
    %v510 = vld [vmem:[#allocation17 + $0x78] sm:$0xff]
    %v511 = vld [vmem:[#allocation17 + $0x80] sm:$0xff]
    %v512 = vld [vmem:[#allocation17 + $0x88] sm:$0xff]
    %v513 = vld [vmem:[#allocation17 + $0x90] sm:$0xff]
    %v514 = vld [vmem:[#allocation17 + $0x98] sm:$0xff]
    %v515 = vld [vmem:[#allocation17 + $0xa0] sm:$0xff]
    %v516 = vld [vmem:[#allocation17 + $0xa8] sm:$0xff]
    %v517 = vld [vmem:[#allocation17 + $0xb0] sm:$0xff]
    %v518 = vld [vmem:[#allocation17 + $0xb8] sm:$0xff]
    %v519 = vld [vmem:[#allocation17 + $0xc0] sm:$0xff]
    %v520 = vld [vmem:[#allocation17 + $0xc8] sm:$0xff]
    %v521 = vld [vmem:[#allocation17 + $0xd0] sm:$0xff]
    %v522 = vld [vmem:[#allocation17 + $0xd8] sm:$0xff]
    %v523 = vld [vmem:[#allocation17 + $0xe0] sm:$0xff]
    %v524 = vld [vmem:[#allocation17 + $0xe8] sm:$0xff]
    %v525 = vld [vmem:[#allocation17 + $0xf0] sm:$0xff]
    %v526 = vld [vmem:[#allocation17 + $0xf8] sm:$0xff]
    %v527 = vld [vmem:[%s12] sm:$0x1]
    %v529 = vperm.slane %v527, 0
    %531 = vmatpush.msra.mxu0 %v510
    %532 = vmatpush.msra.mxu0 %v509
    %533 = vmatpush.msra.mxu0 %v508
    %534 = vmatpush.msra.mxu0 %v507
    %535 = vmatpush.msra.mxu0 %v506
    %536 = vmatpush.msra.mxu0 %v505
    %537 = vmatpush.msra.mxu0 %v504
    %538 = vmatpush.msra.mxu0 %v503
    %539 = vmatpush.msra.mxu0 %v502
    %540 = vmatpush.msra.mxu0 %v501
    %541 = vmatpush.msra.mxu0 %v500
    %542 = vmatpush.msra.mxu0 %v499
    %543 = vmatpush.msra.mxu0 %v498
    %544 = vmatpush.msra.mxu0 %v497
    %545 = vmatpush.msra.mxu0 %v496
    %546 = vmatpush.msra.mxu0 %v495
    %547 = vmatmul.f32.gmra.mxu0 %v493
    %v548 = vpop.f32.mrf.mxu0
    %v549 = vadd.f32 %v529, %v548
    %550 = vdwg.mxu0
    %551 = vmatpush.msra.mxu0 %v526
    %552 = vmatpush.msra.mxu0 %v525
    %553 = vmatpush.msra.mxu0 %v524
    %554 = vmatpush.msra.mxu0 %v523
    %555 = vmatpush.msra.mxu0 %v522
    %556 = vmatpush.msra.mxu0 %v521
    %557 = vmatpush.msra.mxu0 %v520
    %558 = vmatpush.msra.mxu0 %v519
    %559 = vmatpush.msra.mxu0 %v518
    %560 = vmatpush.msra.mxu0 %v517
    %561 = vmatpush.msra.mxu0 %v516
    %562 = vmatpush.msra.mxu0 %v515
    %563 = vmatpush.msra.mxu0 %v514
    %564 = vmatpush.msra.mxu0 %v513
    %565 = vmatpush.msra.mxu0 %v512
    %566 = vmatpush.msra.mxu0 %v511
    %567 = vmatmul.f32.gmra.mxu0 %v494
    %v568 = vpop.f32.mrf.mxu0
    %v569 = vadd.f32 %v549, %v568
    %570 = vdwg.mxu0
    %v571 = vtanh.pop %v569
    %v572 = vld [vmem:[#allocation10] sm:$0x1]
    %v574 = vperm.slane %v572, 0
    %v576 = vmul.f32 %v571, %v574
    %v577 = vld [vmem:[#allocation11] sm:$0x1]
    %v579 = vperm.slane %v577, 0
    %v581 = vadd.f32 %v576, %v579
    %582 = vst [vmem:[#allocation19] sm:$0xff] %v581
    // Predicated region
    $region94: #{tpu_custom_call.1} parent=1 // pred_check
      _
    $region95: #{tpu_custom_call.1} parent=1 // pred_check_branch
      %584 = sbr.rel (0) target = $region97
    $region96: #{tpu_custom_call.1} parent=1 // pred_region
      %586 = vsyncadd [#allocation4], 0
      %s588 = sshll.u32 [#allocation19], 4
      %s589 = int_to_ptr.vmem [resolvable:$true] %s588
      %s590 = sshll.u32 %s13, 4
      %s591 = int_to_ptr.hbm [resolvable:$true] %s590
      %593 = dma.vmem_to_hbm [thread:$0]  %s589, 128, %s591, [#allocation4]
    $region97: #{tpu_custom_call.1} parent=1 // pred_fallthru
      _
    // Predicated region
    $region98: #{tpu_custom_call.1} parent=1 // pred_check
      _
    $region99: #{tpu_custom_call.1} parent=1 // pred_check_branch
      %595 = sbr.rel (0) target = $region101
    $region100: #{tpu_custom_call.1} parent=1 // pred_region
      %597 = dma.done [#allocation4], 128
    $region101: #{tpu_custom_call.1} parent=1 // pred_fallthru
      _
    %598 = vsyncpa [#allocation3], 1
    %599 = vsyncpa [#allocation6], 1
    %600 = vsyncpa [#allocation9], 1
    %601 = vsyncpa [#allocation12], 1
    %602 = vsyncpa [#allocation15], 1
    %603 = vsyncpa [#allocation18], 1
    %604 = vsyncpa [#allocation4], 1

</llo_original>
